<compile_context>
chip_gen: v5e
topology: v5e:2x2
jax: 0.10.0
libtpu: 0.0.40
codegen_flags: <defaults>
</compile_context>

<pallas_src>
import functools

import jax
import jax.numpy as jnp
from jax import lax
from jax.experimental import pallas as pl
from jax.experimental.pallas import tpu as pltpu

_EPS = 1e-10
_LANE = 128


def _soft_label_loss_kernel(score_ref, mask_ref, labels_ref, psn_ref,
                            wce_ref, msk_ref,
                            num_acc, den_acc, cnt_acc,
                            *, tn, num_classes, tt, total_t, eps):
    j = pl.program_id(1)                      # position along the T axis

    # ---- init lane-wide running accumulators at the first T tile ----
    @pl.when(j == 0)
    def _():
        num_acc[...] = jnp.zeros_like(num_acc)
        den_acc[...] = jnp.zeros_like(den_acc)
        cnt_acc[...] = jnp.zeros_like(cnt_acc)

    # Class-id iota, shaped like one 128-lane chunk (built once per step,
    # reused for every chunk).  NOTE: if num_classes grows beyond ~32, tile
    # the class axis here to bound vreg pressure.
    cls_iota = lax.broadcasted_iota(jnp.int32, (tn, num_classes, _LANE), 1)

    # ---- hot loop: pure VPU, no cross-lane reductions, no XLU ----
    num_p = None
    den_p = None
    cnt_p = None
    for k in range(tt // _LANE):
        sl = slice(k * _LANE, (k + 1) * _LANE)           # static, 128-aligned
        sc = score_ref[:, sl].astype(jnp.float32)        # (tn*C, 128)
        sc = sc.reshape(tn, num_classes, _LANE)          # (tn, C, 128)
        gm = mask_ref[:, sl].astype(jnp.float32)         # (tn, 128)
        lb = labels_ref[:, sl].astype(jnp.int32)         # (tn, 128)

        m = sc * gm[:, None, :]                                     # pooled num
        h = (lb[:, None, :] == cls_iota).astype(jnp.float32)        # class hits
        if k == 0:
            num_p, den_p, cnt_p = m, gm, h
        else:
            num_p += m
            den_p += gm
            cnt_p += h

    num_acc[...] += num_p            # (tn, C, 128) lane-wide partial sums
    den_acc[...] += den_p            # (tn, 128)
    cnt_acc[...] += cnt_p            # (tn, C, 128)

    # ---- finalize on the last T tile: the only cross-lane reductions ----
    @pl.when(j == pl.num_programs(1) - 1)
    def _():
        pooled = jnp.sum(num_acc[...], axis=-1)                      # (tn, C)
        den = jnp.sum(den_acc[...], axis=-1, keepdims=True)          # (tn, 1)
        counts = jnp.sum(cnt_acc[...], axis=-1)                      # (tn, C)

        cls_score = pooled / (den + eps)
        smooth = counts / float(total_t)                             # soft label
        sample_mask = (jnp.sum(smooth, axis=-1, keepdims=True)
                       != 0.0).astype(jnp.float32)                   # (tn, 1)

        z = cls_score - jnp.max(cls_score, axis=-1, keepdims=True)
        logp = z - jnp.log(jnp.sum(jnp.exp(z), axis=-1, keepdims=True))
        ce = -jnp.sum(smooth * logp, axis=-1, keepdims=True)         # (tn, 1)

        psn = psn_ref[...]                                           # (tn, 1)
        wce_ref[...] = ce * sample_mask / (psn + eps)
        msk_ref[...] = sample_mask


def _pick_batch_tile(n, c):
    """Largest multiple-of-8 divisor of n, capped for dual-TC + scratch size."""
    cap = min(64, max(8, n // 2))                               # keep >=2 N steps
    cap = min(cap, max(8, (2 * 1024 * 1024) // max(1, c * _LANE * 4)))
    best = None
    d = 8
    while d <= min(n, cap):
        if n % d == 0:
            best = d
        d += 8
    return best if best is not None else n      # tn == n is always legal


def _pick_time_tile(t, tt_cap):
    """Return (tt, padded_t); tt is a multiple of the 128-lane width."""
    target = max(_LANE, min(4096, (tt_cap // _LANE) * _LANE))
    if t % _LANE == 0:
        best = _LANE
        d = _LANE
        while d <= min(t, target):
            if t % d == 0:
                best = d
            d += _LANE
        if best >= 1024 or t <= target:
            return best, t                      # exact divisor, no padding
    if t <= target:
        tt = -(-t // _LANE) * _LANE
        return tt, tt
    # Long ragged T: pick the largest tile whose padding waste is small.
    allowed = max(_LANE, t // 16)
    cands = list(range(_LANE, target + 1, _LANE))
    good = [d for d in cands if -(-t // d) * d - t <= allowed]
    if good:
        best = max(good)
    else:
        best = min(cands, key=lambda d: -(-t // d) * d - t)
    return best, -(-t // best) * best


def soft_label_recognition_loss(score, gt_mask, labels, precise_sliding_num,
                                *, num_classes, loss_weight=1.0,
                                ignore_index=-100):
    """Returns {'loss': scalar} matching SoftLabelRocgnitionLoss.forward."""
    n, c, t = score.shape
    assert c == num_classes
    eps = _EPS

    # ---- tile sizes ----
    tn = _pick_batch_tile(n, c)
    # Keep the native-dtype score block around <=2 MiB so double buffers and
    # f32 chunk temporaries stay well inside the v7x 64 MiB VMEM budget.
    tt_cap = max(_LANE, (2 * 1024 * 1024) // max(1, tn * c * score.dtype.itemsize))
    tt, t_pad = _pick_time_tile(t, tt_cap)

    # ---- pad T if needed (zero mask / ignore_index labels => no effect) ----
    if t_pad != t:
        pad_t = t_pad - t
        score = jnp.pad(score, ((0, 0), (0, 0), (0, pad_t)))
        gt_mask = jnp.pad(gt_mask, ((0, 0), (0, pad_t)))
        labels = jnp.pad(labels, ((0, 0), (0, pad_t)),
                         constant_values=ignore_index)

    # ---- input prep: sublane-dense score slab, narrow side streams ----
    score2d = score.reshape(n * c, t_pad)                 # contiguous, free
    mask_x = gt_mask.astype(jnp.bfloat16)                 # 0/1 mask: exact in bf16
    if -128 <= ignore_index <= 127 and num_classes <= 127:
        labels_x = labels.astype(jnp.int8)
    else:
        labels_x = labels.astype(jnp.int32)
    psn2d = jnp.asarray(precise_sliding_num, jnp.float32).reshape(n, 1)

    grid = (n // tn, t_pad // tt)

    kernel = functools.partial(
        _soft_label_loss_kernel,
        tn=tn, num_classes=c, tt=tt, total_t=t, eps=eps)

    scratch = [
        pltpu.VMEM((tn, c, _LANE), jnp.float32),   # lane-wide pooled numerator
        pltpu.VMEM((tn, _LANE), jnp.float32),      # lane-wide mask denominator
        pltpu.VMEM((tn, c, _LANE), jnp.float32),   # lane-wide per-class counts
    ]

    blk_bytes = (tn * c * tt * score2d.dtype.itemsize
                 + tn * tt * mask_x.dtype.itemsize
                 + tn * tt * labels_x.dtype.itemsize)
    scratch_bytes = (2 * tn * c * _LANE + tn * _LANE) * 4
    vmem_limit = int(min(56 * 1024 * 1024,
                         max(32 * 1024 * 1024,
                             3 * blk_bytes + scratch_bytes + (8 << 20))))

    wce, msk = pl.pallas_call(
        kernel,
        out_shape=(jax.ShapeDtypeStruct((n, 1), jnp.float32),
                   jax.ShapeDtypeStruct((n, 1), jnp.float32)),
        grid=grid,
        in_specs=[
            pl.BlockSpec((tn * c, tt), lambda i, j: (i, j)),   # score slab
            pl.BlockSpec((tn, tt), lambda i, j: (i, j)),       # gt_mask (bf16)
            pl.BlockSpec((tn, tt), lambda i, j: (i, j)),       # labels (int8)
            pl.BlockSpec((tn, 1), lambda i, j: (i, 0)),        # precise_sliding_num
        ],
        out_specs=(
            pl.BlockSpec((tn, 1), lambda i, j: (i, 0)),        # per-sample wCE
            pl.BlockSpec((tn, 1), lambda i, j: (i, 0)),        # per-sample mask
        ),
        scratch_shapes=scratch,
        compiler_params=pltpu.CompilerParams(
            dimension_semantics=("parallel", "arbitrary"),
            vmem_limit_bytes=vmem_limit),
        cost_estimate=pl.CostEstimate(
            flops=4 * n * c * t_pad,
            transcendentals=n * c,
            bytes_accessed=(score2d.size * score2d.dtype.itemsize
                            + mask_x.size * mask_x.dtype.itemsize
                            + labels_x.size * labels_x.dtype.itemsize
                            + 3 * n * 4)),
    )(score2d, mask_x, labels_x, psn2d)

    # Tiny final reduction (N elements) in the wrapper keeps per-tile outputs
    # independent so the N axis can shard across TensorCores.
    loss = (jnp.sum(wce) / (jnp.sum(msk) + eps)) * loss_weight
    return {'loss': loss}


def _reference(score, gt_mask, labels, psn, *, num_classes, ignore_index,
               loss_weight):
    """Pure-JAX port of the PyTorch forward, for validation (f32 math)."""
    eps = _EPS
    score = score.astype(jnp.float32)
    gt_mask = gt_mask.astype(jnp.float32)
    pooled = (jnp.sum(score * gt_mask[:, None, :], axis=-1)
              / (jnp.sum(gt_mask, axis=-1, keepdims=True) + eps))
    cls_score = pooled.reshape(-1, num_classes)
    valid = labels != ignore_index
    refine = jnp.where(valid, labels, 0)
    ce_y = jax.nn.one_hot(refine, num_classes)
    ce_y = jnp.where(valid[..., None], ce_y, 0.0)
    smooth = jnp.sum(ce_y, axis=1) / labels.shape[1]
    mask = (jnp.sum(smooth, axis=1) != 0).astype(jnp.float32)
    logp = jax.nn.log_softmax(cls_score, axis=-1)
    ce = -jnp.sum(smooth * logp, axis=-1)
    loss = jnp.sum(ce * mask / (psn + eps)) / (jnp.sum(mask) + eps)
    return loss * loss_weight


if __name__ == "__main__":
    NUM_CLASSES = 8
    IGNORE_INDEX = -100
    LOSS_WEIGHT = 1.0

    def make_inputs(key, n, t, score_dtype):
        ks, km, kl, ki, kp = jax.random.split(key, 5)
        score = jax.random.normal(ks, (n, NUM_CLASSES, t),
                                  dtype=jnp.float32).astype(score_dtype)
        gt_mask = (jax.random.uniform(km, (n, t)) > 0.3).astype(jnp.float32)
        labels = jax.random.randint(kl, (n, t), 0, NUM_CLASSES, dtype=jnp.int32)
        labels = jnp.where(jax.random.uniform(ki, (n, t)) < 0.25,
                           jnp.int32(IGNORE_INDEX), labels)
        psn = jax.random.uniform(kp, (n,), minval=1.0, maxval=3.0
                                 ).astype(jnp.float32)
        return score, gt_mask, labels, psn

    def check(inputs, rtol, atol):
        score, gt_mask, labels, psn = inputs
        out = soft_label_recognition_loss(
            score, gt_mask, labels, psn,
            num_classes=NUM_CLASSES, loss_weight=LOSS_WEIGHT,
            ignore_index=IGNORE_INDEX)
        loss = jax.block_until_ready(out['loss'])
        ref = _reference(score, gt_mask, labels, psn,
                         num_classes=NUM_CLASSES, ignore_index=IGNORE_INDEX,
                         loss_weight=LOSS_WEIGHT)
        assert jnp.allclose(loss, ref, rtol=rtol, atol=atol), (loss, ref)

    key = jax.random.PRNGKey(0)
    k1, k2, k3 = jax.random.split(key, 3)

    # 1) small single-block case (T=16 padded to one 128-lane chunk)
    check(make_inputs(k1, 2, 16, jnp.float32), 1e-5, 1e-6)
    # 2) tiled grid with bf16 score DMA (N=16 -> two parallel N steps)
    check(make_inputs(k2, 16, 1024, jnp.bfloat16), 1e-4, 1e-5)
    # 3) ragged T (not a multiple of 128) exercising the padding / tail fix
    check(make_inputs(k3, 4, 200, jnp.float32), 1e-5, 1e-6)

    print("KERNEL_OK")
</pallas_src>

<mosaic_0001>
module attributes {stable_mosaic.version = 11 : i64} {
  func.func @_soft_label_loss_kernel(%arg0: i32, %arg1: i32, %arg2: memref<16x128xf32, #tpu.memory_space<vmem>>, %arg3: memref<2x128xbf16, #tpu.memory_space<vmem>>, %arg4: memref<2x128xi8, #tpu.memory_space<vmem>>, %arg5: memref<2x1xf32, #tpu.memory_space<vmem>>, %arg6: memref<2x1xf32, #tpu.memory_space<vmem>>, %arg7: memref<2x1xf32, #tpu.memory_space<vmem>>, %arg8: memref<2x8x128xf32, #tpu.memory_space<vmem>>, %arg9: memref<2x128xf32, #tpu.memory_space<vmem>>, %arg10: memref<2x8x128xf32, #tpu.memory_space<vmem>>) attributes {dimension_semantics = [#tpu.dimension_semantics<parallel>, #tpu.dimension_semantics<arbitrary>], iteration_bounds = array<i64: 1, 1>, scalar_prefetch = 0 : i64, scratch_operands = 3 : i64, tpu.core_type = #tpu.core_type<tc>, window_params = [{transform_indices = @transform_0, window_bounds = array<i64: 16, 128>}, {transform_indices = @transform_1, window_bounds = array<i64: 2, 128>}, {transform_indices = @transform_2, window_bounds = array<i64: 2, 128>}, {transform_indices = @transform_3, window_bounds = array<i64: 2, 1>}, {transform_indices = @transform_4, window_bounds = array<i64: 2, 1>}, {transform_indices = @transform_5, window_bounds = array<i64: 2, 1>}]} {
    %c0_i32 = arith.constant 0 : i32
    %0 = arith.cmpi eq, %arg1, %c0_i32 : i32
    %1 = arith.extui %0 : i1 to i32
    %c0_i32_0 = arith.constant 0 : i32
    %2 = arith.cmpi ne, %1, %c0_i32_0 : i32
    scf.if %2 {
      %cst = arith.constant 0.000000e+00 : f32
      %30 = vector.broadcast %cst : f32 to vector<2x8x128xf32>
      %c0_24 = arith.constant 0 : index
      %c0_25 = arith.constant 0 : index
      %c0_26 = arith.constant 0 : index
      %31 = vector.load %arg8[%c0_24, %c0_25, %c0_26] : memref<2x8x128xf32, #tpu.memory_space<vmem>>, vector<2x8x128xf32>
      tpu.vector_store %arg8[%c0_24, %c0_25, %c0_26], %30 {strides = array<i32>} : memref<2x8x128xf32, #tpu.memory_space<vmem>>, vector<2x8x128xf32>,
      %cst_27 = arith.constant 0.000000e+00 : f32
      %32 = vector.broadcast %cst_27 : f32 to vector<2x128xf32>
      %c0_28 = arith.constant 0 : index
      %c0_29 = arith.constant 0 : index
      %33 = vector.load %arg9[%c0_28, %c0_29] : memref<2x128xf32, #tpu.memory_space<vmem>>, vector<2x128xf32>
      tpu.vector_store %arg9[%c0_28, %c0_29], %32 {strides = array<i32>} : memref<2x128xf32, #tpu.memory_space<vmem>>, vector<2x128xf32>,
      %cst_30 = arith.constant 0.000000e+00 : f32
      %34 = vector.broadcast %cst_30 : f32 to vector<2x8x128xf32>
      %c0_31 = arith.constant 0 : index
      %c0_32 = arith.constant 0 : index
      %c0_33 = arith.constant 0 : index
      %35 = vector.load %arg10[%c0_31, %c0_32, %c0_33] : memref<2x8x128xf32, #tpu.memory_space<vmem>>, vector<2x8x128xf32>
      tpu.vector_store %arg10[%c0_31, %c0_32, %c0_33], %34 {strides = array<i32>} : memref<2x8x128xf32, #tpu.memory_space<vmem>>, vector<2x8x128xf32>,
    } else {
    }
    %3 = tpu.iota {dimensions = array<i32: 1>} : vector<2x8x128xi32>
    %c0 = arith.constant 0 : index
    %c0_1 = arith.constant 0 : index
    %4 = vector.load %arg2[%c0, %c0_1] : memref<16x128xf32, #tpu.memory_space<vmem>>, vector<16x128xf32>
    %5 = vector.shape_cast %4 : vector<16x128xf32> to vector<2x8x128xf32>
    %c0_2 = arith.constant 0 : index
    %c0_3 = arith.constant 0 : index
    %6 = vector.load %arg3[%c0_2, %c0_3] : memref<2x128xbf16, #tpu.memory_space<vmem>>, vector<2x128xbf16>
    %7 = arith.extf %6 : vector<2x128xbf16> to vector<2x128xf32>
    %c0_4 = arith.constant 0 : index
    %c0_5 = arith.constant 0 : index
    %8 = vector.load %arg4[%c0_4, %c0_5] : memref<2x128xi8, #tpu.memory_space<vmem>>, vector<2x128xi8>
    %9 = arith.extsi %8 : vector<2x128xi8> to vector<2x128xi32>
    %10 = vector.shape_cast %7 : vector<2x128xf32> to vector<2x1x128xf32>
    %11 = vector.broadcast %10 : vector<2x1x128xf32> to vector<2x8x128xf32>
    %12 = arith.mulf %5, %11 : vector<2x8x128xf32>
    %13 = vector.shape_cast %9 : vector<2x128xi32> to vector<2x1x128xi32>
    %14 = vector.broadcast %13 : vector<2x1x128xi32> to vector<2x8x128xi32>
    %15 = arith.cmpi eq, %14, %3 : vector<2x8x128xi32>
    %16 = arith.extui %15 : vector<2x8x128xi1> to vector<2x8x128xi32>
    %17 = arith.sitofp %16 : vector<2x8x128xi32> to vector<2x8x128xf32>
    %c0_6 = arith.constant 0 : index
    %c0_7 = arith.constant 0 : index
    %c0_8 = arith.constant 0 : index
    %18 = vector.load %arg8[%c0_6, %c0_7, %c0_8] : memref<2x8x128xf32, #tpu.memory_space<vmem>>, vector<2x8x128xf32>
    %19 = arith.addf %18, %12 : vector<2x8x128xf32>
    %c0_9 = arith.constant 0 : index
    %c0_10 = arith.constant 0 : index
    %c0_11 = arith.constant 0 : index
    %20 = vector.load %arg8[%c0_9, %c0_10, %c0_11] : memref<2x8x128xf32, #tpu.memory_space<vmem>>, vector<2x8x128xf32>
    tpu.vector_store %arg8[%c0_9, %c0_10, %c0_11], %19 {strides = array<i32>} : memref<2x8x128xf32, #tpu.memory_space<vmem>>, vector<2x8x128xf32>,
    %c0_12 = arith.constant 0 : index
    %c0_13 = arith.constant 0 : index
    %21 = vector.load %arg9[%c0_12, %c0_13] : memref<2x128xf32, #tpu.memory_space<vmem>>, vector<2x128xf32>
    %22 = arith.addf %21, %7 : vector<2x128xf32>
    %c0_14 = arith.constant 0 : index
    %c0_15 = arith.constant 0 : index
    %23 = vector.load %arg9[%c0_14, %c0_15] : memref<2x128xf32, #tpu.memory_space<vmem>>, vector<2x128xf32>
    tpu.vector_store %arg9[%c0_14, %c0_15], %22 {strides = array<i32>} : memref<2x128xf32, #tpu.memory_space<vmem>>, vector<2x128xf32>,
    %c0_16 = arith.constant 0 : index
    %c0_17 = arith.constant 0 : index
    %c0_18 = arith.constant 0 : index
    %24 = vector.load %arg10[%c0_16, %c0_17, %c0_18] : memref<2x8x128xf32, #tpu.memory_space<vmem>>, vector<2x8x128xf32>
    %25 = arith.addf %24, %17 : vector<2x8x128xf32>
    %c0_19 = arith.constant 0 : index
    %c0_20 = arith.constant 0 : index
    %c0_21 = arith.constant 0 : index
    %26 = vector.load %arg10[%c0_19, %c0_20, %c0_21] : memref<2x8x128xf32, #tpu.memory_space<vmem>>, vector<2x8x128xf32>
    tpu.vector_store %arg10[%c0_19, %c0_20, %c0_21], %25 {strides = array<i32>} : memref<2x8x128xf32, #tpu.memory_space<vmem>>, vector<2x8x128xf32>,
    %c0_i32_22 = arith.constant 0 : i32
    %27 = arith.cmpi eq, %arg1, %c0_i32_22 : i32
    %28 = arith.extui %27 : i1 to i32
    %c0_i32_23 = arith.constant 0 : i32
    %29 = arith.cmpi ne, %28, %c0_i32_23 : i32
    scf.if %29 {
      %c0_24 = arith.constant 0 : index
      %c0_25 = arith.constant 0 : index
      %c0_26 = arith.constant 0 : index
      %30 = vector.load %arg8[%c0_24, %c0_25, %c0_26] : memref<2x8x128xf32, #tpu.memory_space<vmem>>, vector<2x8x128xf32>
      %cst = arith.constant dense<0.000000e+00> : vector<2x8xf32>
      %31 = vector.multi_reduction <add>, %30, %cst [2] : vector<2x8x128xf32> to vector<2x8xf32>
      %c0_27 = arith.constant 0 : index
      %c0_28 = arith.constant 0 : index
      %32 = vector.load %arg9[%c0_27, %c0_28] : memref<2x128xf32, #tpu.memory_space<vmem>>, vector<2x128xf32>
      %cst_29 = arith.constant dense<0.000000e+00> : vector<2xf32>
      %33 = vector.multi_reduction <add>, %32, %cst_29 [1] : vector<2x128xf32> to vector<2xf32>
      %34 = vector.shape_cast %33 : vector<2xf32> to vector<2x1xf32>
      %c0_30 = arith.constant 0 : index
      %c0_31 = arith.constant 0 : index
      %c0_32 = arith.constant 0 : index
      %35 = vector.load %arg10[%c0_30, %c0_31, %c0_32] : memref<2x8x128xf32, #tpu.memory_space<vmem>>, vector<2x8x128xf32>
      %cst_33 = arith.constant dense<0.000000e+00> : vector<2x8xf32>
      %36 = vector.multi_reduction <add>, %35, %cst_33 [2] : vector<2x8x128xf32> to vector<2x8xf32>
      %cst_34 = arith.constant 1.000000e-10 : f32
      %37 = vector.broadcast %cst_34 : f32 to vector<2x1xf32>
      %38 = arith.addf %34, %37 : vector<2x1xf32>
      %39 = vector.broadcast %38 : vector<2x1xf32> to vector<2x8xf32>
      %40 = arith.divf %31, %39 : vector<2x8xf32>
      %cst_35 = arith.constant 1.600000e+01 : f32
      %41 = vector.broadcast %cst_35 : f32 to vector<2x8xf32>
      %42 = arith.divf %36, %41 : vector<2x8xf32>
      %cst_36 = arith.constant dense<0.000000e+00> : vector<2xf32>
      %43 = vector.multi_reduction <add>, %42, %cst_36 [1] : vector<2x8xf32> to vector<2xf32>
      %44 = vector.shape_cast %43 : vector<2xf32> to vector<2x1xf32>
      %cst_37 = arith.constant 0.000000e+00 : f32
      %45 = vector.broadcast %cst_37 : f32 to vector<2x1xf32>
      %46 = arith.cmpf one, %44, %45 : vector<2x1xf32>
      %47 = arith.extui %46 : vector<2x1xi1> to vector<2x1xi32>
      %48 = arith.sitofp %47 : vector<2x1xi32> to vector<2x1xf32>
      %cst_38 = arith.constant dense<0xFF800000> : vector<2xf32>
      %49 = vector.multi_reduction <maximumf>, %40, %cst_38 [1] : vector<2x8xf32> to vector<2xf32>
      %50 = vector.shape_cast %49 : vector<2xf32> to vector<2x1xf32>
      %51 = vector.broadcast %50 : vector<2x1xf32> to vector<2x8xf32>
      %52 = arith.subf %40, %51 : vector<2x8xf32>
      %53 = math.exp %52 : vector<2x8xf32>
      %cst_39 = arith.constant dense<0.000000e+00> : vector<2xf32>
      %54 = vector.multi_reduction <add>, %53, %cst_39 [1] : vector<2x8xf32> to vector<2xf32>
      %55 = vector.shape_cast %54 : vector<2xf32> to vector<2x1xf32>
      %56 = math.log %55 : vector<2x1xf32>
      %57 = vector.broadcast %56 : vector<2x1xf32> to vector<2x8xf32>
      %58 = arith.subf %52, %57 : vector<2x8xf32>
      %59 = arith.mulf %42, %58 : vector<2x8xf32>
      %cst_40 = arith.constant dense<0.000000e+00> : vector<2xf32>
      %60 = vector.multi_reduction <add>, %59, %cst_40 [1] : vector<2x8xf32> to vector<2xf32>
      %61 = vector.shape_cast %60 : vector<2xf32> to vector<2x1xf32>
      %cst_41 = arith.constant 0.000000e+00 : f32
      %62 = vector.broadcast %cst_41 : f32 to vector<2x1xf32>
      %63 = arith.subf %62, %61 : vector<2x1xf32>
      %c0_42 = arith.constant 0 : index
      %c0_43 = arith.constant 0 : index
      %64 = vector.load %arg5[%c0_42, %c0_43] : memref<2x1xf32, #tpu.memory_space<vmem>>, vector<2x1xf32>
      %65 = arith.mulf %63, %48 : vector<2x1xf32>
      %cst_44 = arith.constant 1.000000e-10 : f32
      %66 = vector.broadcast %cst_44 : f32 to vector<2x1xf32>
      %67 = arith.addf %64, %66 : vector<2x1xf32>
      %68 = arith.divf %65, %67 : vector<2x1xf32>
      %c0_45 = arith.constant 0 : index
      %c0_46 = arith.constant 0 : index
      %69 = vector.load %arg6[%c0_45, %c0_46] : memref<2x1xf32, #tpu.memory_space<vmem>>, vector<2x1xf32>
      tpu.vector_store %arg6[%c0_45, %c0_46], %68 {strides = array<i32>} : memref<2x1xf32, #tpu.memory_space<vmem>>, vector<2x1xf32>,
      %c0_47 = arith.constant 0 : index
      %c0_48 = arith.constant 0 : index
      %70 = vector.load %arg7[%c0_47, %c0_48] : memref<2x1xf32, #tpu.memory_space<vmem>>, vector<2x1xf32>
      tpu.vector_store %arg7[%c0_47, %c0_48], %48 {strides = array<i32>} : memref<2x1xf32, #tpu.memory_space<vmem>>, vector<2x1xf32>,
    } else {
    }
    return
  }
  func.func @transform_0(%arg0: i32, %arg1: i32) -> (i32, i32) {
    %c0_i32 = arith.constant 0 : i32
    return %arg0, %arg1 : i32, i32
  }
  func.func @transform_1(%arg0: i32, %arg1: i32) -> (i32, i32) {
    %c0_i32 = arith.constant 0 : i32
    return %arg0, %arg1 : i32, i32
  }
  func.func @transform_2(%arg0: i32, %arg1: i32) -> (i32, i32) {
    %c0_i32 = arith.constant 0 : i32
    return %arg0, %arg1 : i32, i32
  }
  func.func @transform_3(%arg0: i32, %arg1: i32) -> (i32, i32) {
    %c0_i32 = arith.constant 0 : i32
    %c0_i32_0 = arith.constant 0 : i32
    return %arg0, %c0_i32 : i32, i32
  }
  func.func @transform_4(%arg0: i32, %arg1: i32) -> (i32, i32) {
    %c0_i32 = arith.constant 0 : i32
    %c0_i32_0 = arith.constant 0 : i32
    return %arg0, %c0_i32 : i32, i32
  }
  func.func @transform_5(%arg0: i32, %arg1: i32) -> (i32, i32) {
    %c0_i32 = arith.constant 0 : i32
    %c0_i32_0 = arith.constant 0 : i32
    return %arg0, %c0_i32 : i32, i32
  }
}

</mosaic_0001>

<llo_original>
// kernel: tpu_custom_call.1
$region0: #{tpu_custom_call.1}
  #allocation0 [shape = 'u32[]', space=smem, size = 0x4, offset = 0x4, fixed_abs, tag = 'smem constant byte address 0x4 - core index']
  #allocation1 [shape = 'u32[72,128]{1,0:T(1,128)}', space=vmem, size = 0x9000, scoped, tag = 'internal scratch']
  #allocation2 [shape = 'f32[2,8,128]{2,1,0:T(8,128)}', space=vmem, size = 0x2000, scoped, tag = 'scratch operand']
  #allocation3 [shape = 'f32[2,128]{1,0:T(2,128)}', space=vmem, size = 0x400, scoped, tag = 'scratch operand']
  #allocation4 [shape = 'f32[2,8,128]{2,1,0:T(8,128)}', space=vmem, size = 0x2000, scoped, tag = 'scratch operand']
  %s0 = inlined_call_operand.hbm [shape: f32[16,128], index: 0, kind: input, shape index: {}]
  %s1 = inlined_call_operand.vmem [shape: bf16[2,128], index: 1, kind: input, shape index: {}]
  %s2 = inlined_call_operand.vmem [shape: s8[2,128], index: 2, kind: input, shape index: {}]
  %s3 = inlined_call_operand.vmem [shape: f32[2,1], index: 3, kind: input, shape index: {}]
  %s4 = inlined_call_operand.vmem [shape: f32[2,1], index: 4, kind: output, shape index: {0}]
  %s5 = inlined_call_operand.vmem [shape: f32[2,1], index: 5, kind: output, shape index: {1}]
  %6 = xla_tuple %s4, %s5
  %s7 = sld [smem:[#allocation0]]
  $region46: #{tpu_custom_call.1} parent=0
    _
  %s9 = ssub.s32 1, %s7
  %s10 = scalar_select 0, %s9, %s7
  $region1: #{tpu_custom_call.1} parent=0
    #allocation5 [shape = 'u8[8192]{0}', space=vmem, size = 0x2000, scoped, tag = 'input window, operand 0, single buffered']
    #allocation6 [shape = 's32[1]{0}', space=sflag, size = 0x4, scoped, tag = 'scoped memory for tpu_custom_call.1']
    %11 = vsyncpa [#allocation6], 0
    // Predicated region
    $region2: #{tpu_custom_call.1} parent=1 // pred_check
      _
    $region3: #{tpu_custom_call.1} parent=1 // pred_check_branch
      %13 = sbr.rel (0) target = $region5
    $region4: #{tpu_custom_call.1} parent=1 // pred_region
      %15 = vsyncadd [#allocation6], 0
      %s16 = sshll.u32 %s0, 4
      %s17 = int_to_ptr.hbm [resolvable:$true] %s16
      %s18 = sshll.u32 [#allocation5], 4
      %s19 = int_to_ptr.vmem [resolvable:$true] %s18
      %24 = dma.hbm_to_vmem [thread:$0]  %s17, 256, %s19, [#allocation6], 128, 128, 8
    $region5: #{tpu_custom_call.1} parent=1 // pred_fallthru
      _
    // Predicated region
    $region6: #{tpu_custom_call.1} parent=1 // pred_check
      _
    $region7: #{tpu_custom_call.1} parent=1 // pred_check_branch
      %26 = sbr.rel (0) target = $region9
    $region8: #{tpu_custom_call.1} parent=1 // pred_region
      _
    $region9: #{tpu_custom_call.1} parent=1 // pred_fallthru
      _
    // Predicated region
    $region10: #{tpu_custom_call.1} parent=1 // pred_check
      _
    $region11: #{tpu_custom_call.1} parent=1 // pred_check_branch
      %28 = sbr.rel (0) target = $region13
    $region12: #{tpu_custom_call.1} parent=1 // pred_region
      _
    $region13: #{tpu_custom_call.1} parent=1 // pred_fallthru
      _
    // Predicated region
    $region14: #{tpu_custom_call.1} parent=1 // pred_check
      _
    $region15: #{tpu_custom_call.1} parent=1 // pred_check_branch
      %30 = sbr.rel (0) target = $region17
    $region16: #{tpu_custom_call.1} parent=1 // pred_region
      _
    $region17: #{tpu_custom_call.1} parent=1 // pred_fallthru
      _
    // Predicated region
    $region18: #{tpu_custom_call.1} parent=1 // pred_check
      _
    $region19: #{tpu_custom_call.1} parent=1 // pred_check_branch
      %32 = sbr.rel (0) target = $region21
    $region20: #{tpu_custom_call.1} parent=1 // pred_region
      %34 = dma.done [#allocation6], 256
    $region21: #{tpu_custom_call.1} parent=1 // pred_fallthru
      _
    %p35 = scmp.eq.s32.totalorder 0, 0
    // Predicated region
    $region22: #{tpu_custom_call.1} parent=1 // pred_check
      %p36 = pneg %p35
    $region23: #{tpu_custom_call.1} parent=1 // pred_check_branch
      %38 = sbr.rel (%p36) target = $region25
    $region24: #{tpu_custom_call.1} parent=1 // pred_region
      %39 = vst [vmem:[#allocation2] sm:$0xff] 0.0
      %40 = vst [vmem:[#allocation2 + $0x8] sm:$0xff] 0.0
      %41 = vst [vmem:[#allocation3] sm:$0x3] 0.0
      %42 = vst [vmem:[#allocation4] sm:$0xff] 0.0
      %43 = vst [vmem:[#allocation4 + $0x8] sm:$0xff] 0.0
    $region25: #{tpu_custom_call.1} parent=1 // pred_fallthru
      _
    %v44 = vlaneseq
    %v45 = vshrl.u32 %v44, 7
    %v46 = vld [vmem:[#allocation5] sm:$0xff]
    %v47 = vld [vmem:[#allocation5 + $0x8] sm:$0xff]
    %v48 = vld [vmem:[%s1] sm:$0x1]
    %v49 = vunpack.c.l.bf16 %v48
    %v50 = vld [vmem:[%s2] sm:$0x1]
    %v51 = vunpack.c.0.s8 %v50
    %v53 = vrot.slane %v49, 1
    %v54 = vrot.slane %v49, 2
    %v55 = vrot.slane %v49, 3
    %vm56 = vcmask 1040384
    %v57 = vsel %vm56, %v49, %v53
    %vm58 = vcmask 1042434
    %v59 = vsel %vm58, %v54, %v55
    %vm60 = vcmask 1041408
    %v61 = vsel %vm60, %v57, %v59
    %vm62 = vcmask 1041409
    %v63 = vsel %vm62, %v49, %v53
    %vm64 = vcmask 1043459
    %v65 = vsel %vm64, %v54, %v55
    %vm66 = vcmask 1042433
    %v67 = vsel %vm66, %v63, %v65
    %v68 = vrot.slane %v67, 1
    %v69 = vperm.slane %v61, 0
    %v70 = vperm.slane %v68, 0
    %v73 = vmul.f32 %v46, %v69
    %v74 = vmul.f32 %v47, %v70
    %v75 = vrot.slane %v51, 3
    %v76 = vsel %vm56, %v51, %v75
    %v77 = vsel %vm62, %v51, %v75
    %v78 = vrot.slane %v77, 1
    %v79 = vperm.slane %v76, 0
    %v80 = vperm.slane %v78, 0
    %vm81 = vcmp.eq.s32.totalorder %v79, %v45
    %vm82 = vcmp.eq.s32.totalorder %v80, %v45
    %v83 = vsel %vm81, 1, 0
    %v84 = vsel %vm82, 1, 0
    %v85 = vcvt.s32.f32 %v83
    %v86 = vcvt.s32.f32 %v84
    %v87 = vld [vmem:[#allocation2] sm:$0xff]
    %v88 = vld [vmem:[#allocation2 + $0x8] sm:$0xff]
    %v89 = vadd.f32 %v87, %v73
    %v90 = vadd.f32 %v88, %v74
    %91 = vst [vmem:[#allocation2] sm:$0xff] %v89
    %92 = vst [vmem:[#allocation2 + $0x8] sm:$0xff] %v90
    %v93 = vld [vmem:[#allocation3] sm:$0x3]
    %v94 = vadd.f32 %v93, %v49
    %95 = vst [vmem:[#allocation3] sm:$0x3] %v94
    %v96 = vld [vmem:[#allocation4] sm:$0xff]
    %v97 = vld [vmem:[#allocation4 + $0x8] sm:$0xff]
    %v98 = vadd.f32 %v96, %v85
    %v99 = vadd.f32 %v97, %v86
    %100 = vst [vmem:[#allocation4] sm:$0xff] %v98
    %101 = vst [vmem:[#allocation4 + $0x8] sm:$0xff] %v99
    // Predicated region
    $region26: #{tpu_custom_call.1} parent=1 // pred_check
      %p102 = pneg %p35
    $region27: #{tpu_custom_call.1} parent=1 // pred_check_branch
      %104 = sbr.rel (%p102) target = $region29
    $region28: #{tpu_custom_call.1} parent=1 // pred_region
      %v105 = vld [vmem:[#allocation2] sm:$0xff]
      %v106 = vld [vmem:[#allocation2 + $0x8] sm:$0xff]
      %107 = vadd.xlane.f32.xlu0 %v105
      %v108 = vpop.xlane.xlu0 %107
      %109 = vadd.xlane.f32.xlu0 %v106
      %v110 = vpop.xlane.xlu0 %109
      %v111 = vld [vmem:[#allocation3] sm:$0x3]
      %v112 = vsel %vm60, %v111, 0.0
      %113 = vadd.xlane.f32.xlu0 %v112
      %v114 = vpop.xlane.xlu0 %113
      %v115 = vld [vmem:[#allocation4] sm:$0xff]
      %v116 = vld [vmem:[#allocation4 + $0x8] sm:$0xff]
      %117 = vadd.xlane.f32.xlu0 %v115
      %v118 = vpop.xlane.xlu0 %117
      %119 = vadd.xlane.f32.xlu0 %v116
      %v120 = vpop.xlane.xlu0 %119
      %v121 = vadd.f32 %v114, 1e-10
      %v123 = vperm.slane %v121, 0
      %v124 = vperm.slane %v121, 1
      %v127 = vrcp.pop %v123
      %v128 = vmul.f32 %v123, %v127
      %v129 = vsub.f32 1.0, %v128
      %v130 = vmul.f32 %v127, %v129
      %v131 = vadd.f32 %v127, %v130
      %vm132 = vweird.f32 %v123
      %vm133 = vweird.f32 %v127
      %vm134 = vmor %vm132, %vm133
      %v135 = vsel %vm134, %v127, %v131
      %v136 = vand.u32 2147483647, %v123
      %vm137 = vcmp.eq.f32.partialorder %v136, 8.507059e+37
      %v138 = vand.u32 %v123, 2147483648
      %v139 = vor.u32 1.1754944e-38, %v138
      %v140 = vsel %vm137, %v139, %v135
      %v141 = vmul.f32 %v108, %v140
      %v142 = vrcp.pop %v124
      %v143 = vmul.f32 %v124, %v142
      %v144 = vsub.f32 1.0, %v143
      %v145 = vmul.f32 %v142, %v144
      %v146 = vadd.f32 %v142, %v145
      %vm147 = vweird.f32 %v124
      %vm148 = vweird.f32 %v142
      %vm149 = vmor %vm147, %vm148
      %v150 = vsel %vm149, %v142, %v146
      %v151 = vand.u32 2147483647, %v124
      %vm152 = vcmp.eq.f32.partialorder %v151, 8.507059e+37
      %v153 = vand.u32 %v124, 2147483648
      %v154 = vor.u32 1.1754944e-38, %v153
      %v155 = vsel %vm152, %v154, %v150
      %v156 = vmul.f32 %v110, %v155
      %v157 = vrcp.pop 16.0
      %v158 = vmul.f32 16.0, %v157
      %v159 = vsub.f32 1.0, %v158
      %v160 = vmul.f32 %v157, %v159
      %v161 = vadd.f32 %v157, %v160
      %vm162 = vweird.f32 %v157
      %v163 = vsel %vm162, %v157, %v161
      %v164 = vmul.f32 %v118, %v163
      %v165 = vmul.f32 %v120, %v163
      %v168 = vlaneseq
      %v169 = vand.u32 %v168, 127
      %v170 = vperm.slane %v164, %v169
      %v171 = vperm.slane %v165, %v169
      %v172 = vsel %vm62, %v171, %v170
      %vm174 = vcmask 58368
      %v175 = vsel %vm174, %v172, 0.0
      %176 = vadd.xlane.f32.xlu0 %v175
      %v177 = vpop.xlane.xlu0 %176
      %vm178 = vcmp.ne.f32.partialorder %v177, 0.0
      %v179 = vsel %vm178, 1, 0
      %v180 = vcvt.s32.f32 %v179
      %183 = vset.pattern.permute.xlu0 0
      %184 = vperm.xlu0 %183, %v141
      %v185 = vpop.permute.xlu0 %184
      %186 = vset.pattern.permute.xlu0 0
      %187 = vperm.xlu0 %186, %v156
      %v188 = vpop.permute.xlu0 %187
      %v189 = vperm.slane %v185, %v169
      %v190 = vperm.slane %v188, %v169
      %v191 = vsel %vm62, %v190, %v189
      %v193 = vsel %vm174, %v191, -inf
      %194 = vmax.xlane.f32.xlu0 %v193
      %v195 = vpop.xlane.xlu0 %194
      %v197 = vperm.slane %v195, 0
      %v198 = vperm.slane %v195, 1
      %v201 = vsub.f32 %v141, %v197
      %v202 = vsub.f32 %v156, %v198
      %v203 = vmul.f32 %v201, 1.442695
      %v204 = vpow.pop %v203
      %v205 = vmul.f32 %v202, 1.442695
      %v206 = vpow.pop %v205
      %209 = vset.pattern.permute.xlu0 0
      %210 = vperm.xlu0 %209, %v204
      %v211 = vpop.permute.xlu0 %210
      %212 = vset.pattern.permute.xlu0 0
      %213 = vperm.xlu0 %212, %v206
      %v214 = vpop.permute.xlu0 %213
      %v215 = vperm.slane %v211, %v169
      %v216 = vperm.slane %v214, %v169
      %v217 = vsel %vm62, %v216, %v215
      %v219 = vsel %vm174, %v217, 0.0
      %220 = vadd.xlane.f32.xlu0 %v219
      %v221 = vpop.xlane.xlu0 %220
      %v222 = vlog2.pop %v221
      %v223 = vmul.f32 %v222, 0.6931472
      %v225 = vperm.slane %v223, 0
      %v226 = vperm.slane %v223, 1
      %v229 = vsub.f32 %v201, %v225
      %v230 = vsub.f32 %v202, %v226
      %v231 = vmul.f32 %v164, %v229
      %v232 = vmul.f32 %v165, %v230
      %235 = vset.pattern.permute.xlu0 0
      %236 = vperm.xlu0 %235, %v231
      %v237 = vpop.permute.xlu0 %236
      %238 = vset.pattern.permute.xlu0 0
      %239 = vperm.xlu0 %238, %v232
      %v240 = vpop.permute.xlu0 %239
      %v241 = vperm.slane %v237, %v169
      %v242 = vperm.slane %v240, %v169
      %v243 = vsel %vm62, %v242, %v241
      %v245 = vsel %vm174, %v243, 0.0
      %246 = vadd.xlane.f32.xlu0 %v245
      %v247 = vpop.xlane.xlu0 %246
      %v248 = vsub.f32 0.0, %v247
      %v249 = vld [vmem:[%s3] sm:$0x3]
      %v250 = vmul.f32 %v248, %v180
      %v251 = vadd.f32 %v249, 1e-10
      %v252 = vrcp.pop %v251
      %v253 = vmul.f32 %v251, %v252
      %v254 = vsub.f32 1.0, %v253
      %v255 = vmul.f32 %v252, %v254
      %v256 = vadd.f32 %v252, %v255
      %vm257 = vweird.f32 %v251
      %vm258 = vweird.f32 %v252
      %vm259 = vmor %vm257, %vm258
      %v260 = vsel %vm259, %v252, %v256
      %v261 = vand.u32 2147483647, %v251
      %vm262 = vcmp.eq.f32.partialorder %v261, 8.507059e+37
      %v263 = vand.u32 %v251, 2147483648
      %v264 = vor.u32 1.1754944e-38, %v263
      %v265 = vsel %vm262, %v264, %v260
      %v266 = vmul.f32 %v250, %v265
      %vm267 = vcmask 1024
      %268 = vst.msk [vmem:[%s4] sm:$0x3] %vm267, %v266
      %269 = vst.msk [vmem:[%s5] sm:$0x3] %vm267, %v180
    $region29: #{tpu_custom_call.1} parent=1 // pred_fallthru
      _
    // Predicated region
    $region30: #{tpu_custom_call.1} parent=1 // pred_check
      _
    $region31: #{tpu_custom_call.1} parent=1 // pred_check_branch
      %271 = sbr.rel (0) target = $region33
    $region32: #{tpu_custom_call.1} parent=1 // pred_region
      _
    $region33: #{tpu_custom_call.1} parent=1 // pred_fallthru
      _
    // Predicated region
    $region34: #{tpu_custom_call.1} parent=1 // pred_check
      _
    $region35: #{tpu_custom_call.1} parent=1 // pred_check_branch
      %273 = sbr.rel (0) target = $region37
    $region36: #{tpu_custom_call.1} parent=1 // pred_region
      _
    $region37: #{tpu_custom_call.1} parent=1 // pred_fallthru
      _
    // Predicated region
    $region38: #{tpu_custom_call.1} parent=1 // pred_check
      _
    $region39: #{tpu_custom_call.1} parent=1 // pred_check_branch
      %275 = sbr.rel (0) target = $region41
    $region40: #{tpu_custom_call.1} parent=1 // pred_region
      _
    $region41: #{tpu_custom_call.1} parent=1 // pred_fallthru
      _
    // Predicated region
    $region42: #{tpu_custom_call.1} parent=1 // pred_check
      _
    $region43: #{tpu_custom_call.1} parent=1 // pred_check_branch
      %277 = sbr.rel (0) target = $region45
    $region44: #{tpu_custom_call.1} parent=1 // pred_region
      _
    $region45: #{tpu_custom_call.1} parent=1 // pred_fallthru
      _
    %278 = vsyncpa [#allocation6], 1

</llo_original>
